<compile_context>
chip_gen: v7x
topology: tpu7x:2x2x1
jax: 0.10.0
libtpu: 0.0.40
codegen_flags: <defaults>
</compile_context>

<pallas_src>
import inspect
import math

import jax
import jax.numpy as jnp
from jax.experimental import pallas as pl
from jax.experimental.pallas import tpu as pltpu

_LANE = 128

try:
    _SUPPORTS_PIPELINE_MODE = (
        hasattr(pl, "Buffered")
        and "pipeline_mode" in inspect.signature(pl.BlockSpec).parameters
    )
except (TypeError, ValueError):  # pragma: no cover - defensive
    _SUPPORTS_PIPELINE_MODE = False


# ----------------------------------------------------------------------------- kernel
def _patch_embed_kernel(x_ref, w_ref, posb_ref, out_ref):
    # x_ref: (TN, D), w_ref: (D, HdP), posb_ref: (TN, HdP), out_ref: (TN, HdP)
    acc = jnp.dot(x_ref[...], w_ref[...], preferred_element_type=jnp.float32)
    out_ref[...] = (acc + posb_ref[...]).astype(out_ref.dtype)


# -------------------------------------------------------------------------- wrapper utils
def patchify(x, patch_size):
    """rearrange 'b c (nh ph) (nw pw) -> b (nh nw) (ph pw c)' — wrapper-side layout plumbing."""
    B, C, H, W = x.shape
    p = patch_size
    nh, nw = H // p, W // p
    x = x.reshape(B, C, nh, p, nw, p)
    x = jnp.transpose(x, (0, 2, 4, 3, 5, 1))          # b, nh, nw, ph, pw, c
    return x.reshape(B, nh * nw, p * p * C)


def position_embedding(in_height, in_width, patch_size, dim, max_period=10000.0):
    """Matches PatchEmbedding.position_embedding (fixed, non-trainable buffer)."""
    gh = in_height // patch_size
    gw = in_width // patch_size
    grid_h = jnp.arange(gh, dtype=jnp.float32)
    grid_w = jnp.arange(gw, dtype=jnp.float32)
    gh_pos, gw_pos = jnp.meshgrid(grid_h, grid_w, indexing="ij")
    gh_pos = gh_pos.reshape(-1)
    gw_pos = gw_pos.reshape(-1)
    freqs = max_period ** (-jnp.arange(dim // 4, dtype=jnp.float32) / (dim // 4))
    h_emb = jnp.einsum("i,j->ij", gh_pos, freqs)
    h_emb = jnp.concatenate([jnp.sin(h_emb), jnp.cos(h_emb)], axis=-1)
    w_emb = jnp.einsum("i,j->ij", gw_pos, freqs)
    w_emb = jnp.concatenate([jnp.sin(w_emb), jnp.cos(w_emb)], axis=-1)
    return jnp.concatenate([h_emb, w_emb], axis=-1)   # (N, dim)


def _round_up(x, m):
    return ((x + m - 1) // m) * m


def _sublane(dtype):
    # sublane alignment step: 8 rows for 32-bit, 16 for bf16, 32 for int8/fp8
    return {4: 8, 2: 16, 1: 32}.get(jnp.dtype(dtype).itemsize, 8)


def _physical_vmem_bytes():
    try:
        cap = getattr(pltpu.get_tpu_info(), "vmem_capacity_bytes", 0)
        if cap:
            return int(cap)
    except Exception:
        pass
    return 64 * 1024 * 1024   # conservative default (v7x per-TC VMEM)


def _choose_tiling(n, batch, d, hd_pad, dtype, vmem_budget):
    """Pick the sequence tile TN and (possibly padded) N so blocks are legal and fit VMEM."""
    sub = _sublane(dtype)
    item = jnp.dtype(dtype).itemsize
    w_bytes = d * hd_pad * item                        # Buffered(1): single resident copy
    per_row = 2 * (d + 2 * hd_pad) * item              # double-buffered x / pos / out rows
    max_tile = (vmem_budget - w_bytes) // max(per_row, 1)
    max_tile = max(sub, min(1024, max_tile))
    max_tile = (max_tile // sub) * sub

    if n <= max_tile:
        tn = n                                          # single tile == full dim -> always legal
    else:
        tn = 0
        t = max_tile
        while t >= sub:                                 # prefer an aligned divisor (no padding)
            if n % t == 0:
                tn = t
                break
            t -= sub
        if tn == 0:
            tn = max_tile                               # no divisor: pad N up to a tile multiple

    # v7x megacore: make sure the (parallel, parallel) grid has a handful of steps so both
    # TensorCores get work and the double-buffered pipeline has something to overlap.
    while batch * pl.cdiv(n, tn) < 8 and tn > sub:
        cand = max(sub, (((tn + 1) // 2) // sub) * sub)
        if cand == tn:
            break
        tn = cand

    n_pad = _round_up(n, tn)
    return tn, n_pad


# ---------------------------------------------------------------------------- forward
def patch_embedding_forward(x, w, b, pos, *, patch_size):
    """x: (B,C,H,W); w: (D,Hd); b: (Hd,); pos: (N,Hd) or (1,N,Hd).  Returns (B, N, Hd) in x.dtype."""
    patches = patchify(x, patch_size)                   # (B, N, D)
    B, N, D = patches.shape
    if pos.ndim == 3:
        pos = pos[0]
    Hd = w.shape[1]

    # Fold the bias into the fixed positional table: one fewer operand, one fewer VPU add.
    pos_b = pos + b[None, :]                            # (N, Hd)

    # Lane-dense hidden dim: pad to a multiple of 128 (unmasked vst stores, dense MXU cols).
    hd_pad = _round_up(Hd, _LANE)
    if hd_pad != Hd:
        w = jnp.pad(w, ((0, 0), (0, hd_pad - Hd)))
        pos_b = jnp.pad(pos_b, ((0, 0), (0, hd_pad - Hd)))

    # Generation-aware tile sizing against this chip's VMEM (64 MiB/TC v7x, 128 MiB v5e/v6e).
    phys_vmem = _physical_vmem_bytes()
    budget = int(phys_vmem * 0.7)
    tn, n_pad = _choose_tiling(N, B, D, hd_pad, patches.dtype, budget)
    if n_pad != N:
        patches = jnp.pad(patches, ((0, 0), (0, n_pad - N), (0, 0)))
        pos_b = jnp.pad(pos_b, ((0, n_pad - N), (0, 0)))

    item = jnp.dtype(patches.dtype).itemsize
    vmem_est = D * hd_pad * item + tn * 2 * (D + 2 * hd_pad) * item
    vmem_limit = int(min(phys_vmem, max(32 * 1024 * 1024, vmem_est * 3 // 2 + (4 << 20))))

    cost = pl.CostEstimate(
        flops=2 * B * n_pad * D * hd_pad,
        transcendentals=0,
        bytes_accessed=(patches.size + w.size + pos_b.size + B * n_pad * hd_pad) * item,
    )

    # Weight: constant block index -> DMA'd once; single-buffered to halve its VMEM footprint.
    w_spec_kwargs = {"pipeline_mode": pl.Buffered(1)} if _SUPPORTS_PIPELINE_MODE else {}
    w_spec = pl.BlockSpec((D, hd_pad), lambda ni, bi: (0, 0), **w_spec_kwargs)

    # Grid (N tiles, batch) with batch innermost: pos(+bias) tile index depends only on ni,
    # so Pallas skips its re-DMA across consecutive batch steps.
    grid = (n_pad // tn, B)

    out = pl.pallas_call(
        _patch_embed_kernel,
        out_shape=jax.ShapeDtypeStruct((B, n_pad, hd_pad), x.dtype),
        grid=grid,
        in_specs=[
            pl.BlockSpec((None, tn, D), lambda ni, bi: (bi, ni, 0)),   # patch tile (batch squeezed)
            w_spec,                                                    # weight: VMEM-resident
            pl.BlockSpec((tn, hd_pad), lambda ni, bi: (ni, 0)),        # pos+bias tile (reused over batch)
        ],
        out_specs=pl.BlockSpec((None, tn, hd_pad), lambda ni, bi: (bi, ni, 0)),
        compiler_params=pltpu.CompilerParams(
            dimension_semantics=("parallel", "parallel"),
            vmem_limit_bytes=vmem_limit,
        ),
        cost_estimate=cost,
    )(patches, w, pos_b)

    if n_pad != N or hd_pad != Hd:
        out = out[:, :N, :Hd]
    return out


# ------------------------------------------------------------------------------- demo
if __name__ == "__main__":
    # Small shapes consistent with the module's forward.
    B, C, H, W = 2, 4, 16, 16
    patch_size = 4
    hidden = 32                                  # must be divisible by 4 for the sin/cos pos-emb

    D = C * patch_size ** 2                      # 64
    N = (H // patch_size) * (W // patch_size)    # 16

    root = jax.random.PRNGKey(0)
    k_x, k_w = jax.random.split(root, 2)

    x = jax.random.normal(k_x, (B, C, H, W), dtype=jnp.float32)

    # nn.Linear(patch_dim, hidden): xavier-uniform weight (stored transposed: (D, hidden)), zero bias.
    bound = math.sqrt(6.0 / (D + hidden))
    w = jax.random.uniform(k_w, (D, hidden), dtype=jnp.float32, minval=-bound, maxval=bound)
    b = jnp.zeros((hidden,), dtype=jnp.float32)

    pos = position_embedding(H, W, patch_size, hidden)   # (N, hidden), fixed buffer

    out = patch_embedding_forward(x, w, b, pos, patch_size=patch_size)
    out = jax.block_until_ready(out)

    # Pure-JAX reference: patchify -> linear -> + pos_emb
    patches_ref = patchify(x, patch_size)
    ref = patches_ref @ w + b[None, None, :] + pos[None, :, :]

    assert out.shape == (B, N, hidden)
    assert jnp.allclose(out, ref, atol=1e-5, rtol=1e-5), "mismatch vs reference PatchEmbedding"

    print("KERNEL_OK")
</pallas_src>

<mosaic_0001>
module attributes {stable_mosaic.version = 11 : i64} {
  func.func @_patch_embed_kernel(%arg0: i32, %arg1: i32, %arg2: memref<1x8x64xf32, #tpu.memory_space<vmem>>, %arg3: memref<64x128xf32, #tpu.memory_space<vmem>>, %arg4: memref<8x128xf32, #tpu.memory_space<vmem>>, %arg5: memref<1x8x128xf32, #tpu.memory_space<vmem>>) attributes {dimension_semantics = [#tpu.dimension_semantics<parallel>, #tpu.dimension_semantics<parallel>], iteration_bounds = array<i64: 2, 2>, scalar_prefetch = 0 : i64, scratch_operands = 0 : i64, tpu.core_type = #tpu.core_type<tc>, window_params = [{transform_indices = @transform_0, window_bounds = array<i64: 1, 8, 64>}, {pipeline_mode = #tpu.pipeline_mode<synchronous>, transform_indices = @transform_1, window_bounds = array<i64: 64, 128>}, {transform_indices = @transform_2, window_bounds = array<i64: 8, 128>}, {transform_indices = @transform_3, window_bounds = array<i64: 1, 8, 128>}]} {
    %c0 = arith.constant 0 : index
    %c0_0 = arith.constant 0 : index
    %c0_1 = arith.constant 0 : index
    %0 = vector.load %arg2[%c0, %c0_0, %c0_1] : memref<1x8x64xf32, #tpu.memory_space<vmem>>, vector<1x8x64xf32>
    %1 = vector.shape_cast %0 : vector<1x8x64xf32> to vector<8x64xf32>
    %c0_2 = arith.constant 0 : index
    %c0_3 = arith.constant 0 : index
    %2 = vector.load %arg3[%c0_2, %c0_3] : memref<64x128xf32, #tpu.memory_space<vmem>>, vector<64x128xf32>
    %cst = arith.constant dense<0.000000e+00> : vector<8x128xf32>
    %3 = tpu.matmul %1, %2, %cst {dimension_numbers = #tpu.dot_dimension_numbers<[1], [0], [0], [1], [0, 0, 1, 1], [], []>} : vector<8x64xf32>, vector<64x128xf32>, vector<8x128xf32> -> vector<8x128xf32>
    %c0_4 = arith.constant 0 : index
    %c0_5 = arith.constant 0 : index
    %4 = vector.load %arg4[%c0_4, %c0_5] : memref<8x128xf32, #tpu.memory_space<vmem>>, vector<8x128xf32>
    %5 = arith.addf %3, %4 : vector<8x128xf32>
    %c0_6 = arith.constant 0 : index
    %c0_7 = arith.constant 0 : index
    %c0_8 = arith.constant 0 : index
    %6 = vector.load %arg5[%c0_6, %c0_7, %c0_8] : memref<1x8x128xf32, #tpu.memory_space<vmem>>, vector<1x8x128xf32>
    %7 = vector.shape_cast %6 : vector<1x8x128xf32> to vector<8x128xf32>
    %8 = vector.shape_cast %5 : vector<8x128xf32> to vector<1x8x128xf32>
    tpu.vector_store %arg5[%c0_6, %c0_7, %c0_8], %8 {strides = array<i32>} : memref<1x8x128xf32, #tpu.memory_space<vmem>>, vector<1x8x128xf32>,
    return
  }
  func.func @transform_0(%arg0: i32, %arg1: i32) -> (i32, i32, i32) {
    %c0_i32 = arith.constant 0 : i32
    %c0_i32_0 = arith.constant 0 : i32
    return %arg1, %arg0, %c0_i32 : i32, i32, i32
  }
  func.func @transform_1(%arg0: i32, %arg1: i32) -> (i32, i32) {
    %c0_i32 = arith.constant 0 : i32
    %c0_i32_0 = arith.constant 0 : i32
    %c0_i32_1 = arith.constant 0 : i32
    return %c0_i32, %c0_i32_0 : i32, i32
  }
  func.func @transform_2(%arg0: i32, %arg1: i32) -> (i32, i32) {
    %c0_i32 = arith.constant 0 : i32
    %c0_i32_0 = arith.constant 0 : i32
    return %arg0, %c0_i32 : i32, i32
  }
  func.func @transform_3(%arg0: i32, %arg1: i32) -> (i32, i32, i32) {
    %c0_i32 = arith.constant 0 : i32
    %c0_i32_0 = arith.constant 0 : i32
    return %arg1, %arg0, %c0_i32 : i32, i32, i32
  }
}

</mosaic_0001>

<llo_original>
// kernel: tpu_custom_call.1
$region0: #{tpu_custom_call.1}
  #allocation0 [shape = 'u32[]', space=smem, size = 0x4, offset = 0x4, fixed_abs, tag = 'smem constant byte address 0x4 - core index']
  #allocation1 [shape = 'u32[144,128]{1,0:T(1,128)}', space=vmem, size = 0x12000, scoped, tag = 'internal scratch']
  %s0 = inlined_call_operand.hbm [shape: f32[2,16,64], index: 0, kind: input, shape index: {}]
  %s1 = inlined_call_operand.hbm [shape: f32[64,128], index: 1, kind: input, shape index: {}]
  %s2 = inlined_call_operand.hbm [shape: f32[16,128], index: 2, kind: input, shape index: {}]
  %s3 = inlined_call_operand.hbm [shape: f32[2,16,128], index: 3, kind: output, shape index: {}]
  %s4 = sld [smem:[#allocation0]]
  $region57: #{tpu_custom_call.1} parent=0
    _
  %s6 = ssub.s32 1, %s4
  %s7 = scalar_select 0, %s6, %s4
  $region1: #{tpu_custom_call.1} parent=0
    #allocation2 [shape = 'u8[8192]{0}', space=vmem, size = 0x2000, scoped, tag = 'input window, operand 0']
    #allocation3 [shape = 's32[2]{0}', space=sflag, size = 0x8, scoped, tag = 'scoped memory for tpu_custom_call.1']
    #allocation4 [shape = 's32[2]{0}', space=sflag, size = 0x8, scoped, tag = 'scoped memory for tpu_custom_call.1']
    #allocation5 [shape = 'u8[32768]{0}', space=vmem, size = 0x8000, scoped, tag = 'input window, operand 1, single buffered']
    #allocation6 [shape = 's32[1]{0}', space=sflag, size = 0x4, scoped, tag = 'scoped memory for tpu_custom_call.1']
    #allocation7 [shape = 'u8[8192]{0}', space=vmem, size = 0x2000, scoped, tag = 'input window, operand 2']
    #allocation8 [shape = 'u8[8192]{0}', space=vmem, size = 0x2000, scoped, tag = 'output window, operand 0']
    %8 = vsyncpa [#allocation3], 0
    %s9 = scalar_lea.sflag [#allocation3], 1
    %10 = vsyncpa %s9, 0
    %11 = vsyncpa [#allocation6], 0
    %12 = vsyncpa [#allocation4], 0
    %s13 = scalar_lea.sflag [#allocation4], 1
    %14 = vsyncpa %s13, 0
    loop: start=0, step=1, limit=6
    $region2: #{tpu_custom_call.1} parent=1 // loop_pre_header
      _
    $region3: #{tpu_custom_call.1} parent=1 // loop_header
      %s16 = sphi 0, %s20
      %p17 = scmp.ge.s32.totalorder %s16, 6
      %s23 = sphi 0, %s35
      %s24 = sphi 0, %s31
      %s25 = sphi 0, %s23
      %s26 = sphi 0, %s24
      %s27 = sphi 0, %s25
      %s28 = sphi 0, %s26
      %s40 = sphi 0, %s42
      %s43 = sphi 0, %s40
      %s44 = sphi 0, %s43
      %s60 = sphi 0, %s44
      %s64 = sphi 0, %s64
      %s66 = sphi 0, %s64
      %s67 = sphi 0, %s66
      %s81 = sphi 0, %s67
      %s87 = sphi 0, %s89
      %s90 = sphi 0, %s87
      %s91 = sphi 0, %s90
      %s107 = sphi 0, %s91
      %s115 = sphi 0, %s117
      %s118 = sphi 0, %s115
      %s119 = sphi 0, %s118
      %s135 = sphi 0, %s119
    $region4: #{tpu_custom_call.1} parent=1 // loop_header_branch
      %19 = sbr.rel (%p17) target = $region8
    $region5: #{tpu_custom_call.1} parent=1 // loop_body
      %s21 = ssub.s32 %s16, 1
      %s22 = ssub.s32 %s16, 2
      %s29 = sadd.s32 1, %s24
      %p30 = scmp.ge.s32.totalorder %s29, 2
      %s31 = scalar_select %p30, 0, %s29
      %s32 = sadd.s32 1, %s23
      %s33 = scalar_select %p30, %s32, %s23
      %p34 = scmp.ge.s32.totalorder %s33, 2
      %s35 = scalar_select %p34, 0, %s33
      %s36 = ssub.s32 %s24, %s31
      %s37 = ssub.s32 %s23, %s35
      %s38 = sor.u32 %s36, %s37
      %p39 = scmp.eq.s32.totalorder %s38, 0
      %s41 = sadd.s32 %s40, 1
      %s42 = scalar_select %p39, %s40, %s41
      %p45 = pneg %p39
      %p46 = scmp.eq.s32.totalorder %s16, 3
      %p47 = por %p45, %p46
      %p48 = scmp.ne.s32.totalorder %s40, %s43
      %p49 = scmp.eq.s32.totalorder %s16, 0
      %p50 = por %p48, %p49
      %p51 = scmp.ne.s32.totalorder %s40, %s43
      %p52 = scmp.eq.s32.totalorder %s21, 3
      %p53 = por %p51, %p52
      %p54 = scmp.ne.s32.totalorder %s43, %s44
      %p55 = scmp.eq.s32.totalorder %s21, 0
      %p56 = por %p54, %p55
      %p57 = scmp.ne.s32.totalorder %s43, %s44
      %p58 = scmp.eq.s32.totalorder %s22, 3
      %p59 = por %p57, %p58
      %p61 = scmp.ne.s32.totalorder %s44, %s60
      %p62 = scmp.eq.s32.totalorder %s22, 0
      %p63 = por %p61, %p62
      %s65 = sadd.s32 %s64, 1
      %p68 = scmp.eq.s32.totalorder %s16, 3
      %p69 = scmp.ne.s32.totalorder %s64, %s66
      %p70 = scmp.eq.s32.totalorder %s16, 0
      %p71 = por %p69, %p70
      %p72 = scmp.ne.s32.totalorder %s64, %s66
      %p73 = scmp.eq.s32.totalorder %s21, 3
      %p74 = por %p72, %p73
      %p75 = scmp.ne.s32.totalorder %s66, %s67
      %p76 = scmp.eq.s32.totalorder %s21, 0
      %p77 = por %p75, %p76
      %p78 = scmp.ne.s32.totalorder %s66, %s67
      %p79 = scmp.eq.s32.totalorder %s22, 3
      %p80 = por %p78, %p79
      %p82 = scmp.ne.s32.totalorder %s67, %s81
      %p83 = scmp.eq.s32.totalorder %s22, 0
      %p84 = por %p82, %p83
      %s85 = ssub.s32 %s23, %s35
      %p86 = scmp.eq.s32.totalorder %s85, 0
      %s88 = sadd.s32 %s87, 1
      %s89 = scalar_select %p86, %s87, %s88
      %p92 = pneg %p86
      %p93 = scmp.eq.s32.totalorder %s16, 3
      %p94 = por %p92, %p93
      %p95 = scmp.ne.s32.totalorder %s87, %s90
      %p96 = scmp.eq.s32.totalorder %s16, 0
      %p97 = por %p95, %p96
      %p98 = scmp.ne.s32.totalorder %s87, %s90
      %p99 = scmp.eq.s32.totalorder %s21, 3
      %p100 = por %p98, %p99
      %p101 = scmp.ne.s32.totalorder %s90, %s91
      %p102 = scmp.eq.s32.totalorder %s21, 0
      %p103 = por %p101, %p102
      %p104 = scmp.ne.s32.totalorder %s90, %s91
      %p105 = scmp.eq.s32.totalorder %s22, 3
      %p106 = por %p104, %p105
      %p108 = scmp.ne.s32.totalorder %s91, %s107
      %p109 = scmp.eq.s32.totalorder %s22, 0
      %p110 = por %p108, %p109
      %s111 = ssub.s32 %s24, %s31
      %s112 = ssub.s32 %s23, %s35
      %s113 = sor.u32 %s111, %s112
      %p114 = scmp.eq.s32.totalorder %s113, 0
      %s116 = sadd.s32 %s115, 1
      %s117 = scalar_select %p114, %s115, %s116
      %p120 = pneg %p114
      %p121 = scmp.eq.s32.totalorder %s16, 3
      %p122 = por %p120, %p121
      %p123 = scmp.ne.s32.totalorder %s115, %s118
      %p124 = scmp.eq.s32.totalorder %s16, 0
      %p125 = por %p123, %p124
      %p126 = scmp.ne.s32.totalorder %s115, %s118
      %p127 = scmp.eq.s32.totalorder %s21, 3
      %p128 = por %p126, %p127
      %p129 = scmp.ne.s32.totalorder %s118, %s119
      %p130 = scmp.eq.s32.totalorder %s21, 0
      %p131 = por %p129, %p130
      %p132 = scmp.ne.s32.totalorder %s118, %s119
      %p133 = scmp.eq.s32.totalorder %s22, 3
      %p134 = por %p132, %p133
      %p136 = scmp.ne.s32.totalorder %s119, %s135
      %p137 = scmp.eq.s32.totalorder %s22, 0
      %p138 = por %p136, %p137
      %p139 = scmp.le.s32.totalorder 1, %s16
      %p140 = scmp.lt.s32.totalorder %s16, 5
      %p141 = pnand %p139, %p140
      %p142 = pneg %p141
      // Predicated region
      $region9: #{tpu_custom_call.1} parent=5 // pred_check
        _
      $region10: #{tpu_custom_call.1} parent=5 // pred_check_branch
        %144 = sbr.rel (%p141) target = $region12
      $region11: #{tpu_custom_call.1} parent=5 // pred_region
        %s145 = ssub.s32 %s16, 1
        // Predicated region
        $region13: #{tpu_custom_call.1} parent=11 // pred_check
          %p146 = pneg %p77
        $region14: #{tpu_custom_call.1} parent=11 // pred_check_branch
          %148 = sbr.rel (%p146) target = $region16
        $region15: #{tpu_custom_call.1} parent=11 // pred_region
          %s150 = ssub.s32 1024, 1024
          %151 = vsyncadd [#allocation6], %s150
          %s152 = sshll.u32 [#allocation5], 4
          %s153 = int_to_ptr.vmem [resolvable:$true] %s152
          %158 = dma.hbm_to_vmem [thread:$0]  %s1, 1024, %s153, [#allocation6], 128, 128, 8
        $region16: #{tpu_custom_call.1} parent=11 // pred_fallthru
          _
      $region12: #{tpu_custom_call.1} parent=5 // pred_fallthru
        _
      %p159 = scmp.lt.s32.totalorder %s16, 4
      // Predicated region
      $region17: #{tpu_custom_call.1} parent=5 // pred_check
        %p160 = pneg %p159
      $region18: #{tpu_custom_call.1} parent=5 // pred_check_branch
        %162 = sbr.rel (%p160) target = $region20
      $region19: #{tpu_custom_call.1} parent=5 // pred_region
        // Predicated region
        $region21: #{tpu_custom_call.1} parent=19 // pred_check
          %p163 = pneg %p50
        $region22: #{tpu_custom_call.1} parent=19 // pred_check_branch
          %165 = sbr.rel (%p163) target = $region24
        $region23: #{tpu_custom_call.1} parent=19 // pred_region
          %s166 = sand.u32 %s16, 1
          %s167 = scalar_lea.sflag [#allocation3], %s166
          %s168 = sand.u32 %s40, 1
          %s169 = smul.addr %s168, 8
          %s170 = scalar_lea.vmem [#allocation2], %s169
          %s172 = ssub.s32 128, 128
          %173 = vsyncadd %s167, %s172
          %s174 = smul.addr %s24, 2
          %s175 = sadd.s32 %s23, %s174
          %s176 = smul.addr %s175, 128
          %s177 = scalar_lea.hbm %s0, %s176
          %s179 = sshll.u32 %s170, 4
          %s180 = int_to_ptr.vmem [resolvable:$true] %s179
          %182 = dma.hbm_to_vmem [thread:$0]  %s177, 128, %s180, %s167
        $region24: #{tpu_custom_call.1} parent=19 // pred_fallthru
          _
        // Predicated region
        $region25: #{tpu_custom_call.1} parent=19 // pred_check
          %p183 = pneg %p97
        $region26: #{tpu_custom_call.1} parent=19 // pred_check_branch
          %185 = sbr.rel (%p183) target = $region28
        $region27: #{tpu_custom_call.1} parent=19 // pred_region
          %s186 = sand.u32 %s16, 1
          %s187 = scalar_lea.sflag [#allocation3], %s186
          %s188 = sand.u32 %s87, 1
          %s189 = smul.addr %s188, 8
          %s190 = scalar_lea.vmem [#allocation7], %s189
          %s192 = ssub.s32 128, 128
          %193 = vsyncadd %s187, %s192
          %s194 = smul.addr %s23, 128
          %s195 = scalar_lea.hbm %s2, %s194
          %s197 = sshll.u32 %s190, 4
          %s198 = int_to_ptr.vmem [resolvable:$true] %s197
          %200 = dma.hbm_to_vmem [thread:$0]  %s195, 128, %s198, %s187
        $region28: #{tpu_custom_call.1} parent=19 // pred_fallthru
          _
      $region20: #{tpu_custom_call.1} parent=5 // pred_fallthru
        _
      %p201 = scmp.le.s32.totalorder 1, %s16
      %p202 = scmp.lt.s32.totalorder %s16, 5
      %p203 = pnand %p201, %p202
      %p204 = pneg %p203
      // Predicated region
      $region29: #{tpu_custom_call.1} parent=5 // pred_check
        _
      $region30: #{tpu_custom_call.1} parent=5 // pred_check_branch
        %206 = sbr.rel (%p203) target = $region32
      $region31: #{tpu_custom_call.1} parent=5 // pred_region
        %s207 = ssub.s32 %s16, 1
        %s208 = sand.u32 %s21, 1
        %s209 = scalar_lea.sflag [#allocation3], %s208
        %s210 = sand.u32 %s43, 1
        %s211 = smul.addr %s210, 8
        %s212 = scalar_lea.vmem [#allocation2], %s211
        // Predicated region
        $region33: #{tpu_custom_call.1} parent=31 // pred_check
          %p213 = pneg %p56
        $region34: #{tpu_custom_call.1} parent=31 // pred_check_branch
          %215 = sbr.rel (%p213) target = $region36
        $region35: #{tpu_custom_call.1} parent=31 // pred_region
          %216 = dma.done %s209, 128
        $region36: #{tpu_custom_call.1} parent=31 // pred_fallthru
          _
        // Predicated region
        $region37: #{tpu_custom_call.1} parent=31 // pred_check
          %p217 = pneg %p77
        $region38: #{tpu_custom_call.1} parent=31 // pred_check_branch
          %219 = sbr.rel (%p217) target = $region40
        $region39: #{tpu_custom_call.1} parent=31 // pred_region
          %220 = dma.done [#allocation6], 1024
        $region40: #{tpu_custom_call.1} parent=31 // pred_fallthru
          _
        %s221 = sand.u32 %s21, 1
        %s222 = scalar_lea.sflag [#allocation3], %s221
        %s223 = sand.u32 %s90, 1
        %s224 = smul.addr %s223, 8
        %s225 = scalar_lea.vmem [#allocation7], %s224
        // Predicated region
        $region41: #{tpu_custom_call.1} parent=31 // pred_check
          %p226 = pneg %p103
        $region42: #{tpu_custom_call.1} parent=31 // pred_check_branch
          %228 = sbr.rel (%p226) target = $region44
        $region43: #{tpu_custom_call.1} parent=31 // pred_region
          %229 = dma.done %s222, 128
        $region44: #{tpu_custom_call.1} parent=31 // pred_fallthru
          _
        %s230 = sand.u32 %s21, 1
        %s231 = scalar_lea.sflag [#allocation3], %s230
        %s232 = sand.u32 %s43, 1
        %s233 = smul.addr %s232, 8
        %s234 = scalar_lea.vmem [#allocation2], %s233
        %p235 = pneg %p56
        %p236 = pneg %p53
        %p237 = pneg %p77
        %p238 = pneg %p74
        %s239 = sand.u32 %s21, 1
        %s240 = scalar_lea.sflag [#allocation3], %s239
        %s241 = sand.u32 %s90, 1
        %s242 = smul.addr %s241, 8
        %s243 = scalar_lea.vmem [#allocation7], %s242
        %p244 = pneg %p103
        %p245 = pneg %p100
        %p246 = pneg %p131
        %p247 = pneg %p128
        %s248 = sand.u32 %s118, 1
        %s249 = scalar_lea.sflag [#allocation4], %s248
        %s250 = sand.u32 %s118, 1
        %s251 = smul.addr %s250, 8
        %s252 = scalar_lea.vmem [#allocation8], %s251
        %v253 = vld [vmem:[%s212] sm:$0xff]
        %v254 = vld [vmem:[#allocation5] sm:$0xff]
        %v255 = vld [vmem:[#allocation5 + $0x8] sm:$0xff]
        %v256 = vld [vmem:[#allocation5 + $0x10] sm:$0xff]
        %v257 = vld [vmem:[#allocation5 + $0x18] sm:$0xff]
        %v258 = vld [vmem:[#allocation5 + $0x20] sm:$0xff]
        %v259 = vld [vmem:[#allocation5 + $0x28] sm:$0xff]
        %v260 = vld [vmem:[#allocation5 + $0x30] sm:$0xff]
        %v261 = vld [vmem:[#allocation5 + $0x38] sm:$0xff]
        %v262 = vld [vmem:[%s225] sm:$0xff]
        %vm263 = vcmask 523264
        %v265 = vsel %vm263, %v253, 0
        %267 = vmatprep.subr.mxu0 0.0
        %268 = vmatpush1.msra.mxu0 %v254
        %269 = vmatprep.subr.mxu0 0.0
        %270 = vmatpush1.msra.mxu0 %v255
        %271 = vmatprep.subr.mxu0 0.0
        %272 = vmatpush1.msra.mxu0 %v256
        %273 = vmatprep.subr.mxu0 0.0
        %274 = vmatpush1.msra.mxu0 %v257
        %275 = vmatprep.subr.mxu0 0.0
        %276 = vmatpush1.msra.mxu0 %v258
        %277 = vmatprep.subr.mxu0 0.0
        %278 = vmatpush1.msra.mxu0 %v259
        %279 = vmatprep.subr.mxu0 0.0
        %280 = vmatpush1.msra.mxu0 %v260
        %281 = vmatprep.subr.mxu0 0.0
        %282 = vmatpush1.msra.mxu0 %v261
        %283 = vmatprep.subr.mxu0 0.0
        %284 = vmatpush1.msra.mxu0 0.0
        %285 = vmatprep.subr.mxu0 0.0
        %286 = vmatpush1.msra.mxu0 0.0
        %287 = vmatprep.subr.mxu0 0.0
        %288 = vmatpush1.msra.mxu0 0.0
        %289 = vmatprep.subr.mxu0 0.0
        %290 = vmatpush1.msra.mxu0 0.0
        %291 = vmatprep.subr.mxu0 0.0
        %292 = vmatpush1.msra.mxu0 0.0
        %293 = vmatprep.subr.mxu0 0.0
        %294 = vmatpush1.msra.mxu0 0.0
        %295 = vmatprep.subr.mxu0 0.0
        %296 = vmatpush1.msra.mxu0 0.0
        %297 = vmatprep.subr.mxu0 0.0
        %298 = vmatpush1.msra.mxu0 0.0
        %299 = vmatprep.subr.mxu0 0.0
        %300 = vmatpush1.msra.mxu0 0.0
        %301 = vmatprep.subr.mxu0 0.0
        %302 = vmatpush1.msra.mxu0 0.0
        %303 = vmatprep.subr.mxu0 0.0
        %304 = vmatpush1.msra.mxu0 0.0
        %305 = vmatprep.subr.mxu0 0.0
        %306 = vmatpush1.msra.mxu0 0.0
        %307 = vmatprep.subr.mxu0 0.0
        %308 = vmatpush1.msra.mxu0 0.0
        %309 = vmatprep.subr.mxu0 0.0
        %310 = vmatpush1.msra.mxu0 0.0
        %311 = vmatprep.subr.mxu0 0.0
        %312 = vmatpush1.msra.mxu0 0.0
        %313 = vmatprep.subr.mxu0 0.0
        %314 = vmatpush1.msra.mxu0 0.0
        %315 = vmatprep.subr.mxu0 0.0
        %316 = vmatpush1.msra.mxu0 0.0
        %317 = vmatprep.subr.mxu0 0.0
        %318 = vmatpush1.msra.mxu0 0.0
        %319 = vmatprep.subr.mxu0 0.0
        %320 = vmatpush1.msra.mxu0 0.0
        %321 = vmatprep.subr.mxu0 0.0
        %322 = vmatpush1.msra.mxu0 0.0
        %323 = vmatprep.subr.mxu0 0.0
        %324 = vmatpush1.msra.mxu0 0.0
        %325 = vmatprep.subr.mxu0 0.0
        %326 = vmatpush1.msra.mxu0 0.0
        %327 = vmatprep.subr.mxu0 0.0
        %328 = vmatpush1.msra.mxu0 0.0
        %329 = vmatprep.subr.mxu0 0.0
        %330 = vmatpush1.msra.mxu0 0.0
        %331 = vmatprep.mubr.f32.mxu0 0.0
        %332 = vmatmul.mubr.f32.gmra.mrb[0].mxu0 %v265
        %v333 = vpop.f32.mrb[0].mxu0
        %v334 = vadd.f32 %v262, %v333
        %v335 = vpop.f32.mrb[0].mxu0
        %336 = vdwg.mxu0
        %337 = vst [vmem:[%s252] sm:$0xff] %v334
        %s338 = sand.u32 %s118, 1
        %s339 = scalar_lea.sflag [#allocation4], %s338
        %s340 = sand.u32 %s118, 1
        %s341 = smul.addr %s340, 8
        %s342 = scalar_lea.vmem [#allocation8], %s341
        // Predicated region
        $region45: #{tpu_custom_call.1} parent=31 // pred_check
          %p343 = pneg %p128
        $region46: #{tpu_custom_call.1} parent=31 // pred_check_branch
          %345 = sbr.rel (%p343) target = $region48
        $region47: #{tpu_custom_call.1} parent=31 // pred_region
          %s347 = ssub.s32 128, 128
          %348 = vsyncadd %s339, %s347
          %s349 = smul.addr %s26, 2
          %s350 = sadd.s32 %s25, %s349
          %s351 = smul.addr %s350, 128
          %s352 = scalar_lea.hbm %s3, %s351
          %s354 = sshll.u32 %s342, 4
          %s355 = int_to_ptr.vmem [resolvable:$true] %s354
          %357 = dma.vmem_to_hbm [thread:$0]  %s355, 128, %s352, %s339
        $region48: #{tpu_custom_call.1} parent=31 // pred_fallthru
          _
      $region32: #{tpu_custom_call.1} parent=5 // pred_fallthru
        _
      %p358 = scmp.le.s32.totalorder 2, %s16
      // Predicated region
      $region49: #{tpu_custom_call.1} parent=5 // pred_check
        %p359 = pneg %p358
      $region50: #{tpu_custom_call.1} parent=5 // pred_check_branch
        %361 = sbr.rel (%p359) target = $region52
      $region51: #{tpu_custom_call.1} parent=5 // pred_region
        %s362 = ssub.s32 %s16, 2
        // Predicated region
        $region53: #{tpu_custom_call.1} parent=51 // pred_check
          %p363 = pneg %p134
        $region54: #{tpu_custom_call.1} parent=51 // pred_check_branch
          %365 = sbr.rel (%p363) target = $region56
        $region55: #{tpu_custom_call.1} parent=51 // pred_region
          %s366 = sand.u32 %s119, 1
          %s367 = scalar_lea.sflag [#allocation4], %s366
          %s368 = sand.u32 %s119, 1
          %s369 = smul.addr %s368, 8
          %s370 = scalar_lea.vmem [#allocation8], %s369
          %371 = dma.done %s367, 128
        $region56: #{tpu_custom_call.1} parent=51 // pred_fallthru
          _
      $region52: #{tpu_custom_call.1} parent=5 // pred_fallthru
        _
    $region6: #{tpu_custom_call.1} parent=1 // loop_footer
      %s20 = sadd.s32 1, %s16
    $region7: #{tpu_custom_call.1} parent=1 // loop_footer_branch
      %15 = sbr.rel target = $region3
    $region8: #{tpu_custom_call.1} parent=1 // loop_exit
      _
    %372 = vsyncpa [#allocation3], 1
    %s373 = scalar_lea.sflag [#allocation3], 1
    %374 = vsyncpa %s373, 1
    %375 = vsyncpa [#allocation6], 1
    %376 = vsyncpa [#allocation4], 1
    %s377 = scalar_lea.sflag [#allocation4], 1
    %378 = vsyncpa %s377, 1

</llo_original>
